<compile_context>
chip_gen: v5e
topology: v5e:2x2
jax: 0.10.0
libtpu: 0.0.40
codegen_flags: <defaults>
</compile_context>

<pallas_src>
import functools

import jax
import jax.numpy as jnp
from jax.experimental import pallas as pl
from jax.experimental.pallas import tpu as pltpu

LANE = 128
VMEM_LIMIT = 32 * 1024 * 1024   # safe on v7x (64 MiB physical); plenty for 512-tiles
SMALL_N_THRESHOLD = 1024        # whole problem fits comfortably in VMEM below this


def _round_up(x, m):
    return ((x + m - 1) // m) * m


# --------------------------------------------------------------------------
# Small-N path: whole 2-layer forward fused into one single-step kernel.
# --------------------------------------------------------------------------
def _fused_gcn_kernel(a_ref, x_ref, w1_ref, b1_ref, w2_ref, b2_ref, o_ref):
    a = a_ref[...]                                                   # (N, N) bf16, resident
    s1 = jnp.dot(x_ref[...], w1_ref[...], preferred_element_type=jnp.float32)
    h = jnp.dot(a, s1.astype(jnp.bfloat16), preferred_element_type=jnp.float32)
    h = jnp.maximum(h + b1_ref[...], 0.0)
    s2 = jnp.dot(h.astype(jnp.bfloat16), w2_ref[...], preferred_element_type=jnp.float32)
    out = jnp.dot(a, s2.astype(jnp.bfloat16), preferred_element_type=jnp.float32) + b2_ref[...]
    o_ref[...] = out.astype(o_ref.dtype)


def _fused_small_gcn(adj_bf16, x_bf16, w1p, b1p, w2p, b2p):
    n, f = x_bf16.shape
    h_pad = w1p.shape[1]
    o_pad = w2p.shape[1]
    flops = 2 * (n * f * h_pad + n * n * h_pad + n * h_pad * o_pad + n * n * o_pad)
    bytes_accessed = (n * n * 2 + n * f * 2 + f * h_pad * 2 + h_pad * o_pad * 2
                      + 4 * (h_pad + o_pad) + n * o_pad * 4)
    return pl.pallas_call(
        _fused_gcn_kernel,
        out_shape=jax.ShapeDtypeStruct((n, o_pad), jnp.float32),
        grid_spec=pltpu.PrefetchScalarGridSpec(
            num_scalar_prefetch=0,
            grid=(1,),
            in_specs=[
                pl.BlockSpec((n, n), lambda i: (0, 0)),        # adjacency (resident)
                pl.BlockSpec((n, f), lambda i: (0, 0)),        # features
                pl.BlockSpec((f, h_pad), lambda i: (0, 0)),    # W1
                pl.BlockSpec((1, h_pad), lambda i: (0, 0)),    # b1
                pl.BlockSpec((h_pad, o_pad), lambda i: (0, 0)),# W2
                pl.BlockSpec((1, o_pad), lambda i: (0, 0)),    # b2
            ],
            out_specs=pl.BlockSpec((n, o_pad), lambda i: (0, 0)),
        ),
        compiler_params=pltpu.CompilerParams(vmem_limit_bytes=VMEM_LIMIT),
        cost_estimate=pl.CostEstimate(flops=flops, transcendentals=0,
                                      bytes_accessed=bytes_accessed),
    )(adj_bf16, x_bf16, w1p, b1p, w2p, b2p)


# --------------------------------------------------------------------------
# Tiled path (large N): support matmul kernel + adjacency aggregation kernel.
# --------------------------------------------------------------------------
def _support_kernel(x_ref, w_ref, o_ref):
    # S = X @ W, computed ONCE per layer (hoisted out of the aggregation kernel).
    o_ref[...] = jnp.dot(x_ref[...], w_ref[...],
                         preferred_element_type=jnp.float32).astype(o_ref.dtype)


def _support(x, w, *, tr):
    n, f = x.shape
    out = w.shape[1]
    assert n % tr == 0 and out % LANE == 0
    flops = 2 * n * f * out
    bytes_accessed = n * f * 2 + f * out * 2 + n * out * 2
    return pl.pallas_call(
        _support_kernel,
        out_shape=jax.ShapeDtypeStruct((n, out), jnp.bfloat16),
        grid_spec=pltpu.PrefetchScalarGridSpec(
            num_scalar_prefetch=0,
            grid=(n // tr,),
            in_specs=[
                pl.BlockSpec((tr, f), lambda i: (i, 0)),
                pl.BlockSpec((f, out), lambda i: (0, 0)),      # weight resident
            ],
            out_specs=pl.BlockSpec((tr, out), lambda i: (i, 0)),
        ),
        compiler_params=pltpu.CompilerParams(
            dimension_semantics=("parallel",),
            vmem_limit_bytes=VMEM_LIMIT,
        ),
        cost_estimate=pl.CostEstimate(flops=flops, transcendentals=0,
                                      bytes_accessed=bytes_accessed),
    )(x, w)


def _aggregate_kernel(a_ref, s_ref, b_ref, out_ref, acc_ref, *, apply_relu):
    """out = A @ S + b (optional ReLU). Grid = (row tiles, contraction tiles)."""
    k = pl.program_id(1)

    @pl.when(k == 0)
    def _():
        acc_ref[...] = jnp.zeros_like(acc_ref)

    # (tm, tk) @ (tk, OUT) on the MXU, f32 accumulate in VMEM scratch.
    acc_ref[...] += jnp.dot(a_ref[...], s_ref[...],
                            preferred_element_type=jnp.float32)

    @pl.when(k == pl.num_programs(1) - 1)
    def _():
        result = acc_ref[...] + b_ref[...]
        if apply_relu:
            result = jnp.maximum(result, 0.0)
        out_ref[...] = result.astype(out_ref.dtype)


def _aggregate(adj, support, bias, *, apply_relu, out_dtype, tm, tk):
    n = adj.shape[0]
    out = support.shape[1]
    assert n % tm == 0 and n % tk == 0 and out % LANE == 0
    flops = 2 * n * n * out
    bytes_accessed = (n * n * adj.dtype.itemsize
                      + (n // tm) * n * out * support.dtype.itemsize
                      + out * bias.dtype.itemsize
                      + n * out * jnp.dtype(out_dtype).itemsize)
    kernel = functools.partial(_aggregate_kernel, apply_relu=apply_relu)
    return pl.pallas_call(
        kernel,
        out_shape=jax.ShapeDtypeStruct((n, out), out_dtype),
        grid_spec=pltpu.PrefetchScalarGridSpec(
            num_scalar_prefetch=0,
            grid=(n // tm, n // tk),
            in_specs=[
                # adjacency is the only large always-changing stream; add
                # pipeline_mode=pl.Buffered(3) here if a profile shows exposed DMA.
                pl.BlockSpec((tm, tk), lambda i, k: (i, k)),
                pl.BlockSpec((tk, out), lambda i, k: (k, 0)),  # precomputed support
                pl.BlockSpec((1, out), lambda i, k: (0, 0)),   # bias (resident)
            ],
            out_specs=pl.BlockSpec((tm, out), lambda i, k: (i, 0)),
            scratch_shapes=[pltpu.VMEM((tm, out), jnp.float32)],
        ),
        compiler_params=pltpu.CompilerParams(
            dimension_semantics=("parallel", "arbitrary"),
            vmem_limit_bytes=VMEM_LIMIT,
        ),
        cost_estimate=pl.CostEstimate(flops=flops, transcendentals=0,
                                      bytes_accessed=bytes_accessed),
    )(adj, support, bias)


# --------------------------------------------------------------------------
# Wrapper: 2-layer GCN forward.
# --------------------------------------------------------------------------
@functools.partial(jax.jit, static_argnames=("tile",))
def gcn_net(adjacency, feature, w1, b1, w2, b2, tile=512):
    """logits = A @ relu(A @ (X@W1) + b1) @ W2 + b2."""
    n, f = feature.shape
    hidden = w1.shape[1]
    out_dim = w2.shape[1]
    h_pad = _round_up(hidden, LANE)
    o_pad = _round_up(out_dim, LANE)

    # bf16 MXU operands; biases stay f32 (added after the f32 accumulate).
    # Hidden / output channels are zero-padded to lane multiples (exact).
    w1p = jnp.pad(w1.astype(jnp.bfloat16), ((0, 0), (0, h_pad - hidden)))
    b1p = jnp.pad(b1.astype(jnp.float32), (0, h_pad - hidden)).reshape(1, h_pad)
    w2p = jnp.pad(w2.astype(jnp.bfloat16),
                  ((0, h_pad - hidden), (0, o_pad - out_dim)))
    b2p = jnp.pad(b2.astype(jnp.float32), (0, o_pad - out_dim)).reshape(1, o_pad)

    if n <= SMALL_N_THRESHOLD:
        # Whole problem resident in VMEM: single fused kernel, one grid step.
        adj_bf16 = adjacency.astype(jnp.bfloat16)
        x_bf16 = feature.astype(jnp.bfloat16)
        logits_pad = _fused_small_gcn(adj_bf16, x_bf16, w1p, b1p, w2p, b2p)
        return logits_pad[:, :out_dim]

    # Tiled path: pad N up to a tile multiple (zero rows/cols are exact and the
    # padded output rows are sliced off), keep >= 2 row tiles for v7x megacore.
    n_pad = _round_up(n, tile)
    tm = tk = tile
    adj_bf16 = jnp.pad(adjacency, ((0, n_pad - n), (0, n_pad - n))).astype(jnp.bfloat16)
    x_bf16 = jnp.pad(feature, ((0, n_pad - n), (0, 0))).astype(jnp.bfloat16)

    # Layer 1: S1 = X @ W1 (once), H = relu(A @ S1 + b1) kept bf16 + lane-dense.
    s1 = _support(x_bf16, w1p, tr=tile)
    h = _aggregate(adj_bf16, s1, b1p, apply_relu=True,
                   out_dtype=jnp.bfloat16, tm=tm, tk=tk)
    # Layer 2: S2 = H @ W2 (once), logits = A @ S2 + b2.
    s2 = _support(h, w2p, tr=tile)
    logits_pad = _aggregate(adj_bf16, s2, b2p, apply_relu=False,
                            out_dtype=jnp.float32, tm=tm, tk=tk)
    return logits_pad[:n, :out_dim]


def gcn_net_ref(adjacency, feature, w1, b1, w2, b2):
    """Pure-JAX f32 reference mirroring the PyTorch forward."""
    support = feature @ w1
    h = jax.nn.relu(adjacency @ support + b1)
    support2 = h @ w2
    return adjacency @ support2 + b2


def kaiming_uniform(key, shape):
    # PyTorch init.kaiming_uniform_ (a=0): bound = sqrt(6 / fan_in), fan_in = shape[1].
    fan_in = shape[1]
    bound = (6.0 / fan_in) ** 0.5
    return jax.random.uniform(key, shape, jnp.float32, -bound, bound)


def _make_problem(key, n, input_dim, hidden, out_dim):
    k_adj, k_x, k_w1, k_w2 = jax.random.split(key, 4)
    # Deterministic "normalized" adjacency: random non-negative, row-normalized.
    raw = jax.random.uniform(k_adj, (n, n), jnp.float32)
    adjacency = raw / jnp.sum(raw, axis=1, keepdims=True)
    feature = jax.random.normal(k_x, (n, input_dim), jnp.float32)
    # Parameters (mirroring GraphConvolution.reset_parameters: kaiming W, zero bias).
    w1 = kaiming_uniform(k_w1, (input_dim, hidden))
    b1 = jnp.zeros((hidden,), jnp.float32)
    w2 = kaiming_uniform(k_w2, (hidden, out_dim))
    b2 = jnp.zeros((out_dim,), jnp.float32)
    return adjacency, feature, w1, b1, w2, b2


if __name__ == "__main__":
    INPUT_DIM, HIDDEN, OUT_DIM = 16, 64, 2
    key = jax.random.PRNGKey(0)
    k_small, k_large = jax.random.split(key)

    # --- small-N fused path (module-consistent demo shapes) ---
    N_SMALL = 256
    args = _make_problem(k_small, N_SMALL, INPUT_DIM, HIDDEN, OUT_DIM)
    logits = gcn_net(*args)
    jax.block_until_ready(logits)
    expected = gcn_net_ref(*args)
    assert logits.shape == (N_SMALL, OUT_DIM)
    assert jnp.allclose(logits, expected, atol=2e-2, rtol=2e-2), float(
        jnp.max(jnp.abs(logits - expected)))

    # --- tiled path (N not a tile multiple -> exercises padding + 3x3 grid) ---
    N_LARGE = 1400
    args_l = _make_problem(k_large, N_LARGE, INPUT_DIM, HIDDEN, OUT_DIM)
    logits_l = gcn_net(*args_l)
    jax.block_until_ready(logits_l)
    expected_l = gcn_net_ref(*args_l)
    assert logits_l.shape == (N_LARGE, OUT_DIM)
    # bf16 MXU inputs -> tolerance relaxed vs. the pure-f32 reference.
    assert jnp.allclose(logits_l, expected_l, atol=2e-2, rtol=2e-2), float(
        jnp.max(jnp.abs(logits_l - expected_l)))

    print("KERNEL_OK")
</pallas_src>

<mosaic_0001>
module attributes {stable_mosaic.version = 11 : i64} {
  func.func @_fused_gcn_kernel(%arg0: i32, %arg1: memref<256x256xbf16, #tpu.memory_space<vmem>>, %arg2: memref<256x16xbf16, #tpu.memory_space<vmem>>, %arg3: memref<16x128xbf16, #tpu.memory_space<vmem>>, %arg4: memref<1x128xf32, #tpu.memory_space<vmem>>, %arg5: memref<128x128xbf16, #tpu.memory_space<vmem>>, %arg6: memref<1x128xf32, #tpu.memory_space<vmem>>, %arg7: memref<256x128xf32, #tpu.memory_space<vmem>>) attributes {dimension_semantics = [#tpu.dimension_semantics<arbitrary>], iteration_bounds = array<i64: 1>, scalar_prefetch = 0 : i64, scratch_operands = 0 : i64, tpu.core_type = #tpu.core_type<tc>, window_params = [{pipeline_mode = #tpu.pipeline_mode<synchronous>, transform_indices = @transform_0, window_bounds = array<i64: 256, 256>}, {pipeline_mode = #tpu.pipeline_mode<synchronous>, transform_indices = @transform_1, window_bounds = array<i64: 256, 16>}, {pipeline_mode = #tpu.pipeline_mode<synchronous>, transform_indices = @transform_2, window_bounds = array<i64: 16, 128>}, {pipeline_mode = #tpu.pipeline_mode<synchronous>, transform_indices = @transform_3, window_bounds = array<i64: 1, 128>}, {pipeline_mode = #tpu.pipeline_mode<synchronous>, transform_indices = @transform_4, window_bounds = array<i64: 128, 128>}, {pipeline_mode = #tpu.pipeline_mode<synchronous>, transform_indices = @transform_5, window_bounds = array<i64: 1, 128>}, {pipeline_mode = #tpu.pipeline_mode<synchronous>, transform_indices = @transform_6, window_bounds = array<i64: 256, 128>}]} {
    %c0 = arith.constant 0 : index
    %c0_0 = arith.constant 0 : index
    %0 = vector.load %arg1[%c0, %c0_0] : memref<256x256xbf16, #tpu.memory_space<vmem>>, vector<256x256xbf16>
    %c0_1 = arith.constant 0 : index
    %c0_2 = arith.constant 0 : index
    %1 = vector.load %arg2[%c0_1, %c0_2] : memref<256x16xbf16, #tpu.memory_space<vmem>>, vector<256x16xbf16>
    %c0_3 = arith.constant 0 : index
    %c0_4 = arith.constant 0 : index
    %2 = vector.load %arg3[%c0_3, %c0_4] : memref<16x128xbf16, #tpu.memory_space<vmem>>, vector<16x128xbf16>
    %cst = arith.constant dense<0.000000e+00> : vector<256x128xf32>
    %3 = tpu.matmul %1, %2, %cst {dimension_numbers = #tpu.dot_dimension_numbers<[1], [0], [0], [1], [0, 0, 1, 1], [], []>} : vector<256x16xbf16>, vector<16x128xbf16>, vector<256x128xf32> -> vector<256x128xf32>
    %4 = arith.truncf %3 : vector<256x128xf32> to vector<256x128xbf16>
    %cst_5 = arith.constant dense<0.000000e+00> : vector<256x128xf32>
    %5 = tpu.matmul %0, %4, %cst_5 {dimension_numbers = #tpu.dot_dimension_numbers<[1], [0], [0], [1], [0, 0, 1, 1], [], []>} : vector<256x256xbf16>, vector<256x128xbf16>, vector<256x128xf32> -> vector<256x128xf32>
    %c0_6 = arith.constant 0 : index
    %c0_7 = arith.constant 0 : index
    %6 = vector.load %arg4[%c0_6, %c0_7] : memref<1x128xf32, #tpu.memory_space<vmem>>, vector<1x128xf32>
    %7 = vector.broadcast %6 : vector<1x128xf32> to vector<256x128xf32>
    %8 = arith.addf %5, %7 : vector<256x128xf32>
    %cst_8 = arith.constant 0.000000e+00 : f32
    %9 = vector.broadcast %cst_8 : f32 to vector<256x128xf32>
    %10 = arith.maximumf %8, %9 : vector<256x128xf32>
    %11 = arith.truncf %10 : vector<256x128xf32> to vector<256x128xbf16>
    %c0_9 = arith.constant 0 : index
    %c0_10 = arith.constant 0 : index
    %12 = vector.load %arg5[%c0_9, %c0_10] : memref<128x128xbf16, #tpu.memory_space<vmem>>, vector<128x128xbf16>
    %cst_11 = arith.constant dense<0.000000e+00> : vector<256x128xf32>
    %13 = tpu.matmul %11, %12, %cst_11 {dimension_numbers = #tpu.dot_dimension_numbers<[1], [0], [0], [1], [0, 0, 1, 1], [], []>} : vector<256x128xbf16>, vector<128x128xbf16>, vector<256x128xf32> -> vector<256x128xf32>
    %14 = arith.truncf %13 : vector<256x128xf32> to vector<256x128xbf16>
    %cst_12 = arith.constant dense<0.000000e+00> : vector<256x128xf32>
    %15 = tpu.matmul %0, %14, %cst_12 {dimension_numbers = #tpu.dot_dimension_numbers<[1], [0], [0], [1], [0, 0, 1, 1], [], []>} : vector<256x256xbf16>, vector<256x128xbf16>, vector<256x128xf32> -> vector<256x128xf32>
    %c0_13 = arith.constant 0 : index
    %c0_14 = arith.constant 0 : index
    %16 = vector.load %arg6[%c0_13, %c0_14] : memref<1x128xf32, #tpu.memory_space<vmem>>, vector<1x128xf32>
    %17 = vector.broadcast %16 : vector<1x128xf32> to vector<256x128xf32>
    %18 = arith.addf %15, %17 : vector<256x128xf32>
    %c0_15 = arith.constant 0 : index
    %c0_16 = arith.constant 0 : index
    %19 = vector.load %arg7[%c0_15, %c0_16] : memref<256x128xf32, #tpu.memory_space<vmem>>, vector<256x128xf32>
    tpu.vector_store %arg7[%c0_15, %c0_16], %18 {strides = array<i32>} : memref<256x128xf32, #tpu.memory_space<vmem>>, vector<256x128xf32>,
    return
  }
  func.func @transform_0(%arg0: i32) -> (i32, i32) {
    %c0_i32 = arith.constant 0 : i32
    %c0_i32_0 = arith.constant 0 : i32
    %c0_i32_1 = arith.constant 0 : i32
    return %c0_i32, %c0_i32_0 : i32, i32
  }
  func.func @transform_1(%arg0: i32) -> (i32, i32) {
    %c0_i32 = arith.constant 0 : i32
    %c0_i32_0 = arith.constant 0 : i32
    %c0_i32_1 = arith.constant 0 : i32
    return %c0_i32, %c0_i32_0 : i32, i32
  }
  func.func @transform_2(%arg0: i32) -> (i32, i32) {
    %c0_i32 = arith.constant 0 : i32
    %c0_i32_0 = arith.constant 0 : i32
    %c0_i32_1 = arith.constant 0 : i32
    return %c0_i32, %c0_i32_0 : i32, i32
  }
  func.func @transform_3(%arg0: i32) -> (i32, i32) {
    %c0_i32 = arith.constant 0 : i32
    %c0_i32_0 = arith.constant 0 : i32
    %c0_i32_1 = arith.constant 0 : i32
    return %c0_i32, %c0_i32_0 : i32, i32
  }
  func.func @transform_4(%arg0: i32) -> (i32, i32) {
    %c0_i32 = arith.constant 0 : i32
    %c0_i32_0 = arith.constant 0 : i32
    %c0_i32_1 = arith.constant 0 : i32
    return %c0_i32, %c0_i32_0 : i32, i32
  }
  func.func @transform_5(%arg0: i32) -> (i32, i32) {
    %c0_i32 = arith.constant 0 : i32
    %c0_i32_0 = arith.constant 0 : i32
    %c0_i32_1 = arith.constant 0 : i32
    return %c0_i32, %c0_i32_0 : i32, i32
  }
  func.func @transform_6(%arg0: i32) -> (i32, i32) {
    %c0_i32 = arith.constant 0 : i32
    %c0_i32_0 = arith.constant 0 : i32
    %c0_i32_1 = arith.constant 0 : i32
    return %c0_i32, %c0_i32_0 : i32, i32
  }
}

</mosaic_0001>

<llo_original>
// kernel: gcn_net.1
$region0: #{gcn_net.1}
  #allocation0 [shape = 'u32[]', space=smem, size = 0x4, offset = 0x4, fixed_abs, tag = 'smem constant byte address 0x4 - core index']
  #allocation1 [shape = 'u32[72,128]{1,0:T(1,128)}', space=vmem, size = 0x9000, scoped, tag = 'internal scratch']
  %s0 = inlined_call_operand.vmem [shape: bf16[256,256], index: 0, kind: input, shape index: {}]
  %s1 = inlined_call_operand.vmem [shape: bf16[256,16], index: 1, kind: input, shape index: {}]
  %s2 = inlined_call_operand.vmem [shape: bf16[16,128], index: 2, kind: input, shape index: {}]
  %s3 = inlined_call_operand.vmem [shape: f32[1,128], index: 3, kind: input, shape index: {}]
  %s4 = inlined_call_operand.vmem [shape: bf16[128,128], index: 4, kind: input, shape index: {}]
  %s5 = inlined_call_operand.vmem [shape: f32[1,128], index: 5, kind: input, shape index: {}]
  %s6 = inlined_call_operand.vmem [shape: f32[256,128], index: 6, kind: output, shape index: {}]
  %s7 = sld [smem:[#allocation0]]
  $region34: #{gcn_net.1} parent=0
    _
  %s9 = ssub.s32 1, %s7
  %s10 = scalar_select 0, %s9, %s7
  // Predicated region
  $region2: #{gcn_net.1} parent=0 // pred_check
    _
  $region3: #{gcn_net.1} parent=0 // pred_check_branch
    %12 = sbr.rel (0) target = $region5
  $region4: #{gcn_net.1} parent=0 // pred_region
    _
  $region5: #{gcn_net.1} parent=0 // pred_fallthru
    _
  // Predicated region
  $region6: #{gcn_net.1} parent=0 // pred_check
    _
  $region7: #{gcn_net.1} parent=0 // pred_check_branch
    %14 = sbr.rel (0) target = $region9
  $region8: #{gcn_net.1} parent=0 // pred_region
    _
  $region9: #{gcn_net.1} parent=0 // pred_fallthru
    _
  // Predicated region
  $region10: #{gcn_net.1} parent=0 // pred_check
    _
  $region11: #{gcn_net.1} parent=0 // pred_check_branch
    %16 = sbr.rel (0) target = $region13
  $region12: #{gcn_net.1} parent=0 // pred_region
    _
  $region13: #{gcn_net.1} parent=0 // pred_fallthru
    _
  // Predicated region
  $region14: #{gcn_net.1} parent=0 // pred_check
    _
  $region15: #{gcn_net.1} parent=0 // pred_check_branch
    %18 = sbr.rel (0) target = $region17
  $region16: #{gcn_net.1} parent=0 // pred_region
    _
  $region17: #{gcn_net.1} parent=0 // pred_fallthru
    _
  // Predicated region
  $region18: #{gcn_net.1} parent=0 // pred_check
    _
  $region19: #{gcn_net.1} parent=0 // pred_check_branch
    %20 = sbr.rel (0) target = $region21
  $region20: #{gcn_net.1} parent=0 // pred_region
    _
  $region21: #{gcn_net.1} parent=0 // pred_fallthru
    _
  // Predicated region
  $region22: #{gcn_net.1} parent=0 // pred_check
    _
  $region23: #{gcn_net.1} parent=0 // pred_check_branch
    %22 = sbr.rel (0) target = $region25
  $region24: #{gcn_net.1} parent=0 // pred_region
    _
  $region25: #{gcn_net.1} parent=0 // pred_fallthru
    _
  %v24 = vld [vmem:[%s0] sm:$0xff]
  %v25 = vld [vmem:[%s0 + $0x8] sm:$0xff]
  %v26 = vld [vmem:[%s0 + $0x10] sm:$0xff]
  %v27 = vld [vmem:[%s0 + $0x18] sm:$0xff]
  %v28 = vld [vmem:[%s0 + $0x20] sm:$0xff]
  %v29 = vld [vmem:[%s0 + $0x28] sm:$0xff]
  %v30 = vld [vmem:[%s0 + $0x30] sm:$0xff]
  %v31 = vld [vmem:[%s0 + $0x38] sm:$0xff]
  %v32 = vld [vmem:[%s0 + $0x40] sm:$0xff]
  %v33 = vld [vmem:[%s0 + $0x48] sm:$0xff]
  %v34 = vld [vmem:[%s0 + $0x50] sm:$0xff]
  %v35 = vld [vmem:[%s0 + $0x58] sm:$0xff]
  %v36 = vld [vmem:[%s0 + $0x60] sm:$0xff]
  %v37 = vld [vmem:[%s0 + $0x68] sm:$0xff]
  %v38 = vld [vmem:[%s0 + $0x70] sm:$0xff]
  %v39 = vld [vmem:[%s0 + $0x78] sm:$0xff]
  %v40 = vld [vmem:[%s0 + $0x80] sm:$0xff]
  %v41 = vld [vmem:[%s0 + $0x88] sm:$0xff]
  %v42 = vld [vmem:[%s0 + $0x90] sm:$0xff]
  %v43 = vld [vmem:[%s0 + $0x98] sm:$0xff]
  %v44 = vld [vmem:[%s0 + $0xa0] sm:$0xff]
  %v45 = vld [vmem:[%s0 + $0xa8] sm:$0xff]
  %v46 = vld [vmem:[%s0 + $0xb0] sm:$0xff]
  %v47 = vld [vmem:[%s0 + $0xb8] sm:$0xff]
  %v48 = vld [vmem:[%s0 + $0xc0] sm:$0xff]
  %v49 = vld [vmem:[%s0 + $0xc8] sm:$0xff]
  %v50 = vld [vmem:[%s0 + $0xd0] sm:$0xff]
  %v51 = vld [vmem:[%s0 + $0xd8] sm:$0xff]
  %v52 = vld [vmem:[%s0 + $0xe0] sm:$0xff]
  %v53 = vld [vmem:[%s0 + $0xe8] sm:$0xff]
  %v54 = vld [vmem:[%s0 + $0xf0] sm:$0xff]
  %v55 = vld [vmem:[%s0 + $0xf8] sm:$0xff]
  %v56 = vld [vmem:[%s1] sm:$0xf]
  %v57 = vld [vmem:[%s1 + $0x4] sm:$0xf]
  %v58 = vld [vmem:[%s1 + $0x8] sm:$0xf]
  %v59 = vld [vmem:[%s1 + $0xc] sm:$0xf]
  %v60 = vld [vmem:[%s1 + $0x10] sm:$0xf]
  %v61 = vld [vmem:[%s1 + $0x14] sm:$0xf]
  %v62 = vld [vmem:[%s1 + $0x18] sm:$0xf]
  %v63 = vld [vmem:[%s1 + $0x1c] sm:$0xf]
  %v64 = vld [vmem:[%s1 + $0x20] sm:$0xf]
  %v65 = vld [vmem:[%s1 + $0x24] sm:$0xf]
  %v66 = vld [vmem:[%s1 + $0x28] sm:$0xf]
  %v67 = vld [vmem:[%s1 + $0x2c] sm:$0xf]
  %v68 = vld [vmem:[%s1 + $0x30] sm:$0xf]
  %v69 = vld [vmem:[%s1 + $0x34] sm:$0xf]
  %v70 = vld [vmem:[%s1 + $0x38] sm:$0xf]
  %v71 = vld [vmem:[%s1 + $0x3c] sm:$0xf]
  %v72 = vld [vmem:[%s1 + $0x40] sm:$0xf]
  %v73 = vld [vmem:[%s1 + $0x44] sm:$0xf]
  %v74 = vld [vmem:[%s1 + $0x48] sm:$0xf]
  %v75 = vld [vmem:[%s1 + $0x4c] sm:$0xf]
  %v76 = vld [vmem:[%s1 + $0x50] sm:$0xf]
  %v77 = vld [vmem:[%s1 + $0x54] sm:$0xf]
  %v78 = vld [vmem:[%s1 + $0x58] sm:$0xf]
  %v79 = vld [vmem:[%s1 + $0x5c] sm:$0xf]
  %v80 = vld [vmem:[%s1 + $0x60] sm:$0xf]
  %v81 = vld [vmem:[%s1 + $0x64] sm:$0xf]
  %v82 = vld [vmem:[%s1 + $0x68] sm:$0xf]
  %v83 = vld [vmem:[%s1 + $0x6c] sm:$0xf]
  %v84 = vld [vmem:[%s1 + $0x70] sm:$0xf]
  %v85 = vld [vmem:[%s1 + $0x74] sm:$0xf]
  %v86 = vld [vmem:[%s1 + $0x78] sm:$0xf]
  %v87 = vld [vmem:[%s1 + $0x7c] sm:$0xf]
  %v88 = vld [vmem:[%s2] sm:$0xf]
  %v89 = vld [vmem:[%s2 + $0x4] sm:$0xf]
  %v122 = vunpack.c.l.b16 %v56
  %v123 = vunpack.c.l.b16 %v57
  %v124 = vunpack.c.l.b16 %v58
  %v125 = vunpack.c.l.b16 %v59
  %v126 = vunpack.c.l.b16 %v60
  %v127 = vunpack.c.l.b16 %v61
  %v128 = vunpack.c.l.b16 %v62
  %v129 = vunpack.c.l.b16 %v63
  %v130 = vunpack.c.l.b16 %v64
  %v131 = vunpack.c.l.b16 %v65
  %v132 = vunpack.c.l.b16 %v66
  %v133 = vunpack.c.l.b16 %v67
  %v134 = vunpack.c.l.b16 %v68
  %v135 = vunpack.c.l.b16 %v69
  %v136 = vunpack.c.l.b16 %v70
  %v137 = vunpack.c.l.b16 %v71
  %v138 = vunpack.c.l.b16 %v72
  %v139 = vunpack.c.l.b16 %v73
  %v140 = vunpack.c.l.b16 %v74
  %v141 = vunpack.c.l.b16 %v75
  %v142 = vunpack.c.l.b16 %v76
  %v143 = vunpack.c.l.b16 %v77
  %v144 = vunpack.c.l.b16 %v78
  %v145 = vunpack.c.l.b16 %v79
  %v146 = vunpack.c.l.b16 %v80
  %v147 = vunpack.c.l.b16 %v81
  %v148 = vunpack.c.l.b16 %v82
  %v149 = vunpack.c.l.b16 %v83
  %v150 = vunpack.c.l.b16 %v84
  %v151 = vunpack.c.l.b16 %v85
  %v152 = vunpack.c.l.b16 %v86
  %v153 = vunpack.c.l.b16 %v87
  %v154 = vpack.c.b16 %v123, %v122
  %v155 = vpack.c.b16 %v125, %v124
  %v156 = vpack.c.b16 %v127, %v126
  %v157 = vpack.c.b16 %v129, %v128
  %v158 = vpack.c.b16 %v131, %v130
  %v159 = vpack.c.b16 %v133, %v132
  %v160 = vpack.c.b16 %v135, %v134
  %v161 = vpack.c.b16 %v137, %v136
  %v162 = vpack.c.b16 %v139, %v138
  %v163 = vpack.c.b16 %v141, %v140
  %v164 = vpack.c.b16 %v143, %v142
  %v165 = vpack.c.b16 %v145, %v144
  %v166 = vpack.c.b16 %v147, %v146
  %v167 = vpack.c.b16 %v149, %v148
  %v168 = vpack.c.b16 %v151, %v150
  %v169 = vpack.c.b16 %v153, %v152
  %v172 = vunpack.c.l.b16 %v88
  %v173 = vunpack.c.l.b16 %v89
  %v174 = vpack.c.b16 %v173, %v172
  %vm176 = vcmask 130048
  %v178 = vsel %vm176, %v154, 0
  %v181 = vsel %vm176, %v155, 0
  %v184 = vsel %vm176, %v156, 0
  %v187 = vsel %vm176, %v157, 0
  %v190 = vsel %vm176, %v158, 0
  %v193 = vsel %vm176, %v159, 0
  %v196 = vsel %vm176, %v160, 0
  %v199 = vsel %vm176, %v161, 0
  %v202 = vsel %vm176, %v162, 0
  %v205 = vsel %vm176, %v163, 0
  %v208 = vsel %vm176, %v164, 0
  %v211 = vsel %vm176, %v165, 0
  %v214 = vsel %vm176, %v166, 0
  %v217 = vsel %vm176, %v167, 0
  %v220 = vsel %vm176, %v168, 0
  %v223 = vsel %vm176, %v169, 0
  %225 = vmatpush.bf16.msra.mxu0 0
  %226 = vmatpush.bf16.msra.mxu0 0
  %227 = vmatpush.bf16.msra.mxu0 0
  %228 = vmatpush.bf16.msra.mxu0 0
  %229 = vmatpush.bf16.msra.mxu0 0
  %230 = vmatpush.bf16.msra.mxu0 0
  %231 = vmatpush.bf16.msra.mxu0 0
  %232 = vmatpush.bf16.msra.mxu0 %v174
  %233 = vmatmul.bf16.gmra.mxu0 %v178
  %v234 = vpop.f32.mrf.mxu0
  %v235 = vadd.f32 0.0, %v234
  %v236 = vpop.f32.mrf.mxu0
  %v237 = vadd.f32 0.0, %v236
  %238 = vmatmul.bf16.gmra.mxu0 %v181
  %v239 = vpop.f32.mrf.mxu0
  %v240 = vadd.f32 0.0, %v239
  %v241 = vpop.f32.mrf.mxu0
  %v242 = vadd.f32 0.0, %v241
  %243 = vmatmul.bf16.gmra.mxu0 %v184
  %v244 = vpop.f32.mrf.mxu0
  %v245 = vadd.f32 0.0, %v244
  %v246 = vpop.f32.mrf.mxu0
  %v247 = vadd.f32 0.0, %v246
  %248 = vmatmul.bf16.gmra.mxu0 %v187
  %v249 = vpop.f32.mrf.mxu0
  %v250 = vadd.f32 0.0, %v249
  %v251 = vpop.f32.mrf.mxu0
  %v252 = vadd.f32 0.0, %v251
  %253 = vmatmul.bf16.gmra.mxu0 %v190
  %v254 = vpop.f32.mrf.mxu0
  %v255 = vadd.f32 0.0, %v254
  %v256 = vpop.f32.mrf.mxu0
  %v257 = vadd.f32 0.0, %v256
  %258 = vmatmul.bf16.gmra.mxu0 %v193
  %v259 = vpop.f32.mrf.mxu0
  %v260 = vadd.f32 0.0, %v259
  %v261 = vpop.f32.mrf.mxu0
  %v262 = vadd.f32 0.0, %v261
  %263 = vmatmul.bf16.gmra.mxu0 %v196
  %v264 = vpop.f32.mrf.mxu0
  %v265 = vadd.f32 0.0, %v264
  %v266 = vpop.f32.mrf.mxu0
  %v267 = vadd.f32 0.0, %v266
  %268 = vmatmul.bf16.gmra.mxu0 %v199
  %v269 = vpop.f32.mrf.mxu0
  %v270 = vadd.f32 0.0, %v269
  %v271 = vpop.f32.mrf.mxu0
  %v272 = vadd.f32 0.0, %v271
  %273 = vmatmul.bf16.gmra.mxu0 %v202
  %v274 = vpop.f32.mrf.mxu0
  %v275 = vadd.f32 0.0, %v274
  %v276 = vpop.f32.mrf.mxu0
  %v277 = vadd.f32 0.0, %v276
  %278 = vmatmul.bf16.gmra.mxu0 %v205
  %v279 = vpop.f32.mrf.mxu0
  %v280 = vadd.f32 0.0, %v279
  %v281 = vpop.f32.mrf.mxu0
  %v282 = vadd.f32 0.0, %v281
  %283 = vmatmul.bf16.gmra.mxu0 %v208
  %v284 = vpop.f32.mrf.mxu0
  %v285 = vadd.f32 0.0, %v284
  %v286 = vpop.f32.mrf.mxu0
  %v287 = vadd.f32 0.0, %v286
  %288 = vmatmul.bf16.gmra.mxu0 %v211
  %v289 = vpop.f32.mrf.mxu0
  %v290 = vadd.f32 0.0, %v289
  %v291 = vpop.f32.mrf.mxu0
  %v292 = vadd.f32 0.0, %v291
  %293 = vmatmul.bf16.gmra.mxu0 %v214
  %v294 = vpop.f32.mrf.mxu0
  %v295 = vadd.f32 0.0, %v294
  %v296 = vpop.f32.mrf.mxu0
  %v297 = vadd.f32 0.0, %v296
  %298 = vmatmul.bf16.gmra.mxu0 %v217
  %v299 = vpop.f32.mrf.mxu0
  %v300 = vadd.f32 0.0, %v299
  %v301 = vpop.f32.mrf.mxu0
  %v302 = vadd.f32 0.0, %v301
  %303 = vmatmul.bf16.gmra.mxu0 %v220
  %v304 = vpop.f32.mrf.mxu0
  %v305 = vadd.f32 0.0, %v304
  %v306 = vpop.f32.mrf.mxu0
  %v307 = vadd.f32 0.0, %v306
  %308 = vmatmul.bf16.gmra.mxu0 %v223
  %v309 = vpop.f32.mrf.mxu0
  %v310 = vadd.f32 0.0, %v309
  %v311 = vpop.f32.mrf.mxu0
  %v312 = vadd.f32 0.0, %v311
  %313 = vdwg.mxu0
  %v314 = vpack.c.bf16 %v237, %v235
  %v315 = vpack.c.bf16 %v242, %v240
  %v316 = vpack.c.bf16 %v247, %v245
  %v317 = vpack.c.bf16 %v252, %v250
  %v318 = vpack.c.bf16 %v257, %v255
  %v319 = vpack.c.bf16 %v262, %v260
  %v320 = vpack.c.bf16 %v267, %v265
  %v321 = vpack.c.bf16 %v272, %v270
  %v322 = vpack.c.bf16 %v277, %v275
  %v323 = vpack.c.bf16 %v282, %v280
  %v324 = vpack.c.bf16 %v287, %v285
  %v325 = vpack.c.bf16 %v292, %v290
  %v326 = vpack.c.bf16 %v297, %v295
  %v327 = vpack.c.bf16 %v302, %v300
  %v328 = vpack.c.bf16 %v307, %v305
  %v329 = vpack.c.bf16 %v312, %v310
  %v330 = vld [vmem:[%s3] sm:$0x1]
  %v332 = vperm.slane %v330, 0
  %v366 = vunpack.c.l.b16 %v24
  %v367 = vunpack.c.h.b16 %v24
  %v368 = vunpack.c.l.b16 %v25
  %v369 = vunpack.c.h.b16 %v25
  %v370 = vunpack.c.l.b16 %v26
  %v371 = vunpack.c.h.b16 %v26
  %v372 = vunpack.c.l.b16 %v27
  %v373 = vunpack.c.h.b16 %v27
  %v374 = vunpack.c.l.b16 %v28
  %v375 = vunpack.c.h.b16 %v28
  %v376 = vunpack.c.l.b16 %v29
  %v377 = vunpack.c.h.b16 %v29
  %v378 = vunpack.c.l.b16 %v30
  %v379 = vunpack.c.h.b16 %v30
  %v380 = vunpack.c.l.b16 %v31
  %v381 = vunpack.c.h.b16 %v31
  %v382 = vunpack.c.l.b16 %v32
  %v383 = vunpack.c.h.b16 %v32
  %v384 = vunpack.c.l.b16 %v33
  %v385 = vunpack.c.h.b16 %v33
  %v386 = vunpack.c.l.b16 %v34
  %v387 = vunpack.c.h.b16 %v34
  %v388 = vunpack.c.l.b16 %v35
  %v389 = vunpack.c.h.b16 %v35
  %v390 = vunpack.c.l.b16 %v36
  %v391 = vunpack.c.h.b16 %v36
  %v392 = vunpack.c.l.b16 %v37
  %v393 = vunpack.c.h.b16 %v37
  %v394 = vunpack.c.l.b16 %v38
  %v395 = vunpack.c.h.b16 %v38
  %v396 = vunpack.c.l.b16 %v39
  %v397 = vunpack.c.h.b16 %v39
  %v398 = vunpack.c.l.b16 %v40
  %v399 = vunpack.c.h.b16 %v40
  %v400 = vunpack.c.l.b16 %v41
  %v401 = vunpack.c.h.b16 %v41
  %v402 = vunpack.c.l.b16 %v42
  %v403 = vunpack.c.h.b16 %v42
  %v404 = vunpack.c.l.b16 %v43
  %v405 = vunpack.c.h.b16 %v43
  %v406 = vunpack.c.l.b16 %v44
  %v407 = vunpack.c.h.b16 %v44
  %v408 = vunpack.c.l.b16 %v45
  %v409 = vunpack.c.h.b16 %v45
  %v410 = vunpack.c.l.b16 %v46
  %v411 = vunpack.c.h.b16 %v46
  %v412 = vunpack.c.l.b16 %v47
  %v413 = vunpack.c.h.b16 %v47
  %v414 = vunpack.c.l.b16 %v48
  %v415 = vunpack.c.h.b16 %v48
  %v416 = vunpack.c.l.b16 %v49
  %v417 = vunpack.c.h.b16 %v49
  %v418 = vunpack.c.l.b16 %v50
  %v419 = vunpack.c.h.b16 %v50
  %v420 = vunpack.c.l.b16 %v51
  %v421 = vunpack.c.h.b16 %v51
  %v422 = vunpack.c.l.b16 %v52
  %v423 = vunpack.c.h.b16 %v52
  %v424 = vunpack.c.l.b16 %v53
  %v425 = vunpack.c.h.b16 %v53
  %v426 = vunpack.c.l.b16 %v54
  %v427 = vunpack.c.h.b16 %v54
  %v428 = vunpack.c.l.b16 %v55
  %v429 = vunpack.c.h.b16 %v55
  %v430 = vpack.c.b16 %v368, %v366
  %v431 = vpack.c.b16 %v369, %v367
  %v432 = vpack.c.b16 %v372, %v370
  %v433 = vpack.c.b16 %v373, %v371
  %v434 = vpack.c.b16 %v376, %v374
  %v435 = vpack.c.b16 %v377, %v375
  %v436 = vpack.c.b16 %v380, %v378
  %v437 = vpack.c.b16 %v381, %v379
  %v438 = vpack.c.b16 %v384, %v382
  %v439 = vpack.c.b16 %v385, %v383
  %v440 = vpack.c.b16 %v388, %v386
  %v441 = vpack.c.b16 %v389, %v387
  %v442 = vpack.c.b16 %v392, %v390
  %v443 = vpack.c.b16 %v393, %v391
  %v444 = vpack.c.b16 %v396, %v394
  %v445 = vpack.c.b16 %v397, %v395
  %v446 = vpack.c.b16 %v400, %v398
  %v447 = vpack.c.b16 %v401, %v399
  %v448 = vpack.c.b16 %v404, %v402
  %v449 = vpack.c.b16 %v405, %v403
  %v450 = vpack.c.b16 %v408, %v406
  %v451 = vpack.c.b16 %v409, %v407
  %v452 = vpack.c.b16 %v412, %v410
  %v453 = vpack.c.b16 %v413, %v411
  %v454 = vpack.c.b16 %v416, %v414
  %v455 = vpack.c.b16 %v417, %v415
  %v456 = vpack.c.b16 %v420, %v418
  %v457 = vpack.c.b16 %v421, %v419
  %v458 = vpack.c.b16 %v424, %v422
  %v459 = vpack.c.b16 %v425, %v423
  %v460 = vpack.c.b16 %v428, %v426
  %v461 = vpack.c.b16 %v429, %v427
  %494 = vmatpush.bf16.msra.mxu0 %v321
  %495 = vmatpush.bf16.msra.mxu0 %v320
  %496 = vmatpush.bf16.msra.mxu0 %v319
  %497 = vmatpush.bf16.msra.mxu0 %v318
  %498 = vmatpush.bf16.msra.mxu0 %v317
  %499 = vmatpush.bf16.msra.mxu0 %v316
  %500 = vmatpush.bf16.msra.mxu0 %v315
  %501 = vmatpush.bf16.msra.mxu0 %v314
  %502 = vmatmul.bf16.gmra.mxu0 %v430
  %v503 = vpop.f32.mrf.mxu0
  %v504 = vadd.f32 %v332, %v503
  %v505 = vpop.f32.mrf.mxu0
  %v506 = vadd.f32 %v332, %v505
  %507 = vmatmul.bf16.gmra.mxu0 %v432
  %v508 = vpop.f32.mrf.mxu0
  %v509 = vadd.f32 %v332, %v508
  %v510 = vpop.f32.mrf.mxu0
  %v511 = vadd.f32 %v332, %v510
  %512 = vmatmul.bf16.gmra.mxu0 %v434
  %v513 = vpop.f32.mrf.mxu0
  %v514 = vadd.f32 %v332, %v513
  %v515 = vpop.f32.mrf.mxu0
  %v516 = vadd.f32 %v332, %v515
  %517 = vmatmul.bf16.gmra.mxu0 %v436
  %v518 = vpop.f32.mrf.mxu0
  %v519 = vadd.f32 %v332, %v518
  %v520 = vpop.f32.mrf.mxu0
  %v521 = vadd.f32 %v332, %v520
  %522 = vmatmul.bf16.gmra.mxu0 %v438
  %v523 = vpop.f32.mrf.mxu0
  %v524 = vadd.f32 %v332, %v523
  %v525 = vpop.f32.mrf.mxu0
  %v526 = vadd.f32 %v332, %v525
  %527 = vmatmul.bf16.gmra.mxu0 %v440
  %v528 = vpop.f32.mrf.mxu0
  %v529 = vadd.f32 %v332, %v528
  %v530 = vpop.f32.mrf.mxu0
  %v531 = vadd.f32 %v332, %v530
  %532 = vmatmul.bf16.gmra.mxu0 %v442
  %v533 = vpop.f32.mrf.mxu0
  %v534 = vadd.f32 %v332, %v533
  %v535 = vpop.f32.mrf.mxu0
  %v536 = vadd.f32 %v332, %v535
  %537 = vmatmul.bf16.gmra.mxu0 %v444
  %v538 = vpop.f32.mrf.mxu0
  %v539 = vadd.f32 %v332, %v538
  %v540 = vpop.f32.mrf.mxu0
  %v541 = vadd.f32 %v332, %v540
  %542 = vmatmul.bf16.gmra.mxu0 %v446
  %v543 = vpop.f32.mrf.mxu0
  %v544 = vadd.f32 %v332, %v543
  %v545 = vpop.f32.mrf.mxu0
  %v546 = vadd.f32 %v332, %v545
  %547 = vmatmul.bf16.gmra.mxu0 %v448
  %v548 = vpop.f32.mrf.mxu0
  %v549 = vadd.f32 %v332, %v548
  %v550 = vpop.f32.mrf.mxu0
  %v551 = vadd.f32 %v332, %v550
  %552 = vmatmul.bf16.gmra.mxu0 %v450
  %v553 = vpop.f32.mrf.mxu0
  %v554 = vadd.f32 %v332, %v553
  %v555 = vpop.f32.mrf.mxu0
  %v556 = vadd.f32 %v332, %v555
  %557 = vmatmul.bf16.gmra.mxu0 %v452
  %v558 = vpop.f32.mrf.mxu0
  %v559 = vadd.f32 %v332, %v558
  %v560 = vpop.f32.mrf.mxu0
  %v561 = vadd.f32 %v332, %v560
  %562 = vmatmul.bf16.gmra.mxu0 %v454
  %v563 = vpop.f32.mrf.mxu0
  %v564 = vadd.f32 %v332, %v563
  %v565 = vpop.f32.mrf.mxu0
  %v566 = vadd.f32 %v332, %v565
  %567 = vmatmul.bf16.gmra.mxu0 %v456
  %v568 = vpop.f32.mrf.mxu0
  %v569 = vadd.f32 %v332, %v568
  %v570 = vpop.f32.mrf.mxu0
  %v571 = vadd.f32 %v332, %v570
  %572 = vmatmul.bf16.gmra.mxu0 %v458
  %v573 = vpop.f32.mrf.mxu0
  %v574 = vadd.f32 %v332, %v573
  %v575 = vpop.f32.mrf.mxu0
  %v576 = vadd.f32 %v332, %v575
  %577 = vmatmul.bf16.gmra.mxu0 %v460
  %v578 = vpop.f32.mrf.mxu0
  %v579 = vadd.f32 %v332, %v578
  %v580 = vpop.f32.mrf.mxu0
  %v581 = vadd.f32 %v332, %v580
  %582 = vdwg.mxu0
  %583 = vmatpush.bf16.msra.mxu0 %v329
  %584 = vmatpush.bf16.msra.mxu0 %v328
  %585 = vmatpush.bf16.msra.mxu0 %v327
  %586 = vmatpush.bf16.msra.mxu0 %v326
  %587 = vmatpush.bf16.msra.mxu0 %v325
  %588 = vmatpush.bf16.msra.mxu0 %v324
  %589 = vmatpush.bf16.msra.mxu0 %v323
  %590 = vmatpush.bf16.msra.mxu0 %v322
  %591 = vmatmul.bf16.gmra.mxu0 %v431
  %v592 = vpop.f32.mrf.mxu0
  %v593 = vadd.f32 %v504, %v592
  %v594 = vpop.f32.mrf.mxu0
  %v595 = vadd.f32 %v506, %v594
  %596 = vmatmul.bf16.gmra.mxu0 %v433
  %v597 = vpop.f32.mrf.mxu0
  %v598 = vadd.f32 %v509, %v597
  %v599 = vpop.f32.mrf.mxu0
  %v600 = vadd.f32 %v511, %v599
  %601 = vmatmul.bf16.gmra.mxu0 %v435
  %v602 = vpop.f32.mrf.mxu0
  %v603 = vadd.f32 %v514, %v602
  %v604 = vpop.f32.mrf.mxu0
  %v605 = vadd.f32 %v516, %v604
  %606 = vmatmul.bf16.gmra.mxu0 %v437
  %v607 = vpop.f32.mrf.mxu0
  %v608 = vadd.f32 %v519, %v607
  %v609 = vpop.f32.mrf.mxu0
  %v610 = vadd.f32 %v521, %v609
  %611 = vmatmul.bf16.gmra.mxu0 %v439
  %v612 = vpop.f32.mrf.mxu0
  %v613 = vadd.f32 %v524, %v612
  %v614 = vpop.f32.mrf.mxu0
  %v615 = vadd.f32 %v526, %v614
  %616 = vmatmul.bf16.gmra.mxu0 %v441
  %v617 = vpop.f32.mrf.mxu0
  %v618 = vadd.f32 %v529, %v617
  %v619 = vpop.f32.mrf.mxu0
  %v620 = vadd.f32 %v531, %v619
  %621 = vmatmul.bf16.gmra.mxu0 %v443
  %v622 = vpop.f32.mrf.mxu0
  %v623 = vadd.f32 %v534, %v622
  %v624 = vpop.f32.mrf.mxu0
  %v625 = vadd.f32 %v536, %v624
  %626 = vmatmul.bf16.gmra.mxu0 %v445
  %v627 = vpop.f32.mrf.mxu0
  %v628 = vadd.f32 %v539, %v627
  %v629 = vpop.f32.mrf.mxu0
  %v630 = vadd.f32 %v541, %v629
  %631 = vmatmul.bf16.gmra.mxu0 %v447
  %v632 = vpop.f32.mrf.mxu0
  %v633 = vadd.f32 %v544, %v632
  %v634 = vpop.f32.mrf.mxu0
  %v635 = vadd.f32 %v546, %v634
  %636 = vmatmul.bf16.gmra.mxu0 %v449
  %v637 = vpop.f32.mrf.mxu0
  %v638 = vadd.f32 %v549, %v637
  %v639 = vpop.f32.mrf.mxu0
  %v640 = vadd.f32 %v551, %v639
  %641 = vmatmul.bf16.gmra.mxu0 %v451
  %v642 = vpop.f32.mrf.mxu0
  %v643 = vadd.f32 %v554, %v642
  %v644 = vpop.f32.mrf.mxu0
  %v645 = vadd.f32 %v556, %v644
  %646 = vmatmul.bf16.gmra.mxu0 %v453
  %v647 = vpop.f32.mrf.mxu0
  %v648 = vadd.f32 %v559, %v647
  %v649 = vpop.f32.mrf.mxu0
  %v650 = vadd.f32 %v561, %v649
  %651 = vmatmul.bf16.gmra.mxu0 %v455
  %v652 = vpop.f32.mrf.mxu0
  %v653 = vadd.f32 %v564, %v652
  %v654 = vpop.f32.mrf.mxu0
  %v655 = vadd.f32 %v566, %v654
  %656 = vmatmul.bf16.gmra.mxu0 %v457
  %v657 = vpop.f32.mrf.mxu0
  %v658 = vadd.f32 %v569, %v657
  %v659 = vpop.f32.mrf.mxu0
  %v660 = vadd.f32 %v571, %v659
  %661 = vmatmul.bf16.gmra.mxu0 %v459
  %v662 = vpop.f32.mrf.mxu0
  %v663 = vadd.f32 %v574, %v662
  %v664 = vpop.f32.mrf.mxu0
  %v665 = vadd.f32 %v576, %v664
  %666 = vmatmul.bf16.gmra.mxu0 %v461
  %v667 = vpop.f32.mrf.mxu0
  %v668 = vadd.f32 %v579, %v667
  %v669 = vpop.f32.mrf.mxu0
  %v670 = vadd.f32 %v581, %v669
  %671 = vdwg.mxu0
  %v672 = vmax.f32 %v593, 0.0
  %v673 = vmax.f32 %v595, 0.0
  %v674 = vmax.f32 %v598, 0.0
  %v675 = vmax.f32 %v600, 0.0
  %v676 = vmax.f32 %v603, 0.0
  %v677 = vmax.f32 %v605, 0.0
  %v678 = vmax.f32 %v608, 0.0
  %v679 = vmax.f32 %v610, 0.0
  %v680 = vmax.f32 %v613, 0.0
  %v681 = vmax.f32 %v615, 0.0
  %v682 = vmax.f32 %v618, 0.0
  %v683 = vmax.f32 %v620, 0.0
  %v684 = vmax.f32 %v623, 0.0
  %v685 = vmax.f32 %v625, 0.0
  %v686 = vmax.f32 %v628, 0.0
  %v687 = vmax.f32 %v630, 0.0
  %v688 = vmax.f32 %v633, 0.0
  %v689 = vmax.f32 %v635, 0.0
  %v690 = vmax.f32 %v638, 0.0
  %v691 = vmax.f32 %v640, 0.0
  %v692 = vmax.f32 %v643, 0.0
  %v693 = vmax.f32 %v645, 0.0
  %v694 = vmax.f32 %v648, 0.0
  %v695 = vmax.f32 %v650, 0.0
  %v696 = vmax.f32 %v653, 0.0
  %v697 = vmax.f32 %v655, 0.0
  %v698 = vmax.f32 %v658, 0.0
  %v699 = vmax.f32 %v660, 0.0
  %v700 = vmax.f32 %v663, 0.0
  %v701 = vmax.f32 %v665, 0.0
  %v702 = vmax.f32 %v668, 0.0
  %v703 = vmax.f32 %v670, 0.0
  %v704 = vpack.c.bf16 %v673, %v672
  %v705 = vpack.c.bf16 %v675, %v674
  %v706 = vpack.c.bf16 %v677, %v676
  %v707 = vpack.c.bf16 %v679, %v678
  %v708 = vpack.c.bf16 %v681, %v680
  %v709 = vpack.c.bf16 %v683, %v682
  %v710 = vpack.c.bf16 %v685, %v684
  %v711 = vpack.c.bf16 %v687, %v686
  %v712 = vpack.c.bf16 %v689, %v688
  %v713 = vpack.c.bf16 %v691, %v690
  %v714 = vpack.c.bf16 %v693, %v692
  %v715 = vpack.c.bf16 %v695, %v694
  %v716 = vpack.c.bf16 %v697, %v696
  %v717 = vpack.c.bf16 %v699, %v698
  %v718 = vpack.c.bf16 %v701, %v700
  %v719 = vpack.c.bf16 %v703, %v702
  %v720 = vld [vmem:[%s4] sm:$0xf]
  %v721 = vld [vmem:[%s4 + $0x4] sm:$0xf]
  %v722 = vld [vmem:[%s4 + $0x8] sm:$0xf]
  %v723 = vld [vmem:[%s4 + $0xc] sm:$0xf]
  %v724 = vld [vmem:[%s4 + $0x10] sm:$0xf]
  %v725 = vld [vmem:[%s4 + $0x14] sm:$0xf]
  %v726 = vld [vmem:[%s4 + $0x18] sm:$0xf]
  %v727 = vld [vmem:[%s4 + $0x1c] sm:$0xf]
  %v728 = vld [vmem:[%s4 + $0x20] sm:$0xf]
  %v729 = vld [vmem:[%s4 + $0x24] sm:$0xf]
  %v730 = vld [vmem:[%s4 + $0x28] sm:$0xf]
  %v731 = vld [vmem:[%s4 + $0x2c] sm:$0xf]
  %v732 = vld [vmem:[%s4 + $0x30] sm:$0xf]
  %v733 = vld [vmem:[%s4 + $0x34] sm:$0xf]
  %v734 = vld [vmem:[%s4 + $0x38] sm:$0xf]
  %v735 = vld [vmem:[%s4 + $0x3c] sm:$0xf]
  %v752 = vunpack.c.l.b16 %v720
  %v753 = vunpack.c.l.b16 %v721
  %v754 = vunpack.c.l.b16 %v722
  %v755 = vunpack.c.l.b16 %v723
  %v756 = vunpack.c.l.b16 %v724
  %v757 = vunpack.c.l.b16 %v725
  %v758 = vunpack.c.l.b16 %v726
  %v759 = vunpack.c.l.b16 %v727
  %v760 = vunpack.c.l.b16 %v728
  %v761 = vunpack.c.l.b16 %v729
  %v762 = vunpack.c.l.b16 %v730
  %v763 = vunpack.c.l.b16 %v731
  %v764 = vunpack.c.l.b16 %v732
  %v765 = vunpack.c.l.b16 %v733
  %v766 = vunpack.c.l.b16 %v734
  %v767 = vunpack.c.l.b16 %v735
  %v768 = vpack.c.b16 %v753, %v752
  %v769 = vpack.c.b16 %v755, %v754
  %v770 = vpack.c.b16 %v757, %v756
  %v771 = vpack.c.b16 %v759, %v758
  %v772 = vpack.c.b16 %v761, %v760
  %v773 = vpack.c.b16 %v763, %v762
  %v774 = vpack.c.b16 %v765, %v764
  %v775 = vpack.c.b16 %v767, %v766
  %784 = vmatpush.bf16.msra.mxu0 %v775
  %785 = vmatpush.bf16.msra.mxu0 %v774
  %786 = vmatpush.bf16.msra.mxu0 %v773
  %787 = vmatpush.bf16.msra.mxu0 %v772
  %788 = vmatpush.bf16.msra.mxu0 %v771
  %789 = vmatpush.bf16.msra.mxu0 %v770
  %790 = vmatpush.bf16.msra.mxu0 %v769
  %791 = vmatpush.bf16.msra.mxu0 %v768
  %792 = vmatmul.bf16.gmra.mxu0 %v704
  %v793 = vpop.f32.mrf.mxu0
  %v794 = vadd.f32 0.0, %v793
  %v795 = vpop.f32.mrf.mxu0
  %v796 = vadd.f32 0.0, %v795
  %797 = vmatmul.bf16.gmra.mxu0 %v705
  %v798 = vpop.f32.mrf.mxu0
  %v799 = vadd.f32 0.0, %v798
  %v800 = vpop.f32.mrf.mxu0
  %v801 = vadd.f32 0.0, %v800
  %802 = vmatmul.bf16.gmra.mxu0 %v706
  %v803 = vpop.f32.mrf.mxu0
  %v804 = vadd.f32 0.0, %v803
  %v805 = vpop.f32.mrf.mxu0
  %v806 = vadd.f32 0.0, %v805
  %807 = vmatmul.bf16.gmra.mxu0 %v707
  %v808 = vpop.f32.mrf.mxu0
  %v809 = vadd.f32 0.0, %v808
  %v810 = vpop.f32.mrf.mxu0
  %v811 = vadd.f32 0.0, %v810
  %812 = vmatmul.bf16.gmra.mxu0 %v708
  %v813 = vpop.f32.mrf.mxu0
  %v814 = vadd.f32 0.0, %v813
  %v815 = vpop.f32.mrf.mxu0
  %v816 = vadd.f32 0.0, %v815
  %817 = vmatmul.bf16.gmra.mxu0 %v709
  %v818 = vpop.f32.mrf.mxu0
  %v819 = vadd.f32 0.0, %v818
  %v820 = vpop.f32.mrf.mxu0
  %v821 = vadd.f32 0.0, %v820
  %822 = vmatmul.bf16.gmra.mxu0 %v710
  %v823 = vpop.f32.mrf.mxu0
  %v824 = vadd.f32 0.0, %v823
  %v825 = vpop.f32.mrf.mxu0
  %v826 = vadd.f32 0.0, %v825
  %827 = vmatmul.bf16.gmra.mxu0 %v711
  %v828 = vpop.f32.mrf.mxu0
  %v829 = vadd.f32 0.0, %v828
  %v830 = vpop.f32.mrf.mxu0
  %v831 = vadd.f32 0.0, %v830
  %832 = vmatmul.bf16.gmra.mxu0 %v712
  %v833 = vpop.f32.mrf.mxu0
  %v834 = vadd.f32 0.0, %v833
  %v835 = vpop.f32.mrf.mxu0
  %v836 = vadd.f32 0.0, %v835
  %837 = vmatmul.bf16.gmra.mxu0 %v713
  %v838 = vpop.f32.mrf.mxu0
  %v839 = vadd.f32 0.0, %v838
  %v840 = vpop.f32.mrf.mxu0
  %v841 = vadd.f32 0.0, %v840
  %842 = vmatmul.bf16.gmra.mxu0 %v714
  %v843 = vpop.f32.mrf.mxu0
  %v844 = vadd.f32 0.0, %v843
  %v845 = vpop.f32.mrf.mxu0
  %v846 = vadd.f32 0.0, %v845
  %847 = vmatmul.bf16.gmra.mxu0 %v715
  %v848 = vpop.f32.mrf.mxu0
  %v849 = vadd.f32 0.0, %v848
  %v850 = vpop.f32.mrf.mxu0
  %v851 = vadd.f32 0.0, %v850
  %852 = vmatmul.bf16.gmra.mxu0 %v716
  %v853 = vpop.f32.mrf.mxu0
  %v854 = vadd.f32 0.0, %v853
  %v855 = vpop.f32.mrf.mxu0
  %v856 = vadd.f32 0.0, %v855
  %857 = vmatmul.bf16.gmra.mxu0 %v717
  %v858 = vpop.f32.mrf.mxu0
  %v859 = vadd.f32 0.0, %v858
  %v860 = vpop.f32.mrf.mxu0
  %v861 = vadd.f32 0.0, %v860
  %862 = vmatmul.bf16.gmra.mxu0 %v718
  %v863 = vpop.f32.mrf.mxu0
  %v864 = vadd.f32 0.0, %v863
  %v865 = vpop.f32.mrf.mxu0
  %v866 = vadd.f32 0.0, %v865
  %867 = vmatmul.bf16.gmra.mxu0 %v719
  %v868 = vpop.f32.mrf.mxu0
  %v869 = vadd.f32 0.0, %v868
  %v870 = vpop.f32.mrf.mxu0
  %v871 = vadd.f32 0.0, %v870
  %872 = vdwg.mxu0
  %v873 = vpack.c.bf16 %v796, %v794
  %v874 = vpack.c.bf16 %v801, %v799
  %v875 = vpack.c.bf16 %v806, %v804
  %v876 = vpack.c.bf16 %v811, %v809
  %v877 = vpack.c.bf16 %v816, %v814
  %v878 = vpack.c.bf16 %v821, %v819
  %v879 = vpack.c.bf16 %v826, %v824
  %v880 = vpack.c.bf16 %v831, %v829
  %v881 = vpack.c.bf16 %v836, %v834
  %v882 = vpack.c.bf16 %v841, %v839
  %v883 = vpack.c.bf16 %v846, %v844
  %v884 = vpack.c.bf16 %v851, %v849
  %v885 = vpack.c.bf16 %v856, %v854
  %v886 = vpack.c.bf16 %v861, %v859
  %v887 = vpack.c.bf16 %v866, %v864
  %v888 = vpack.c.bf16 %v871, %v869
  %v889 = vld [vmem:[%s5] sm:$0x1]
  %v891 = vperm.slane %v889, 0
  %893 = vmatpush.bf16.msra.mxu0 %v880
  %894 = vmatpush.bf16.msra.mxu0 %v879
  %895 = vmatpush.bf16.msra.mxu0 %v878
  %896 = vmatpush.bf16.msra.mxu0 %v877
  %897 = vmatpush.bf16.msra.mxu0 %v876
  %898 = vmatpush.bf16.msra.mxu0 %v875
  %899 = vmatpush.bf16.msra.mxu0 %v874
  %900 = vmatpush.bf16.msra.mxu0 %v873
  %901 = vmatmul.bf16.gmra.mxu0 %v430
  %v902 = vpop.f32.mrf.mxu0
  %v903 = vadd.f32 %v891, %v902
  %v904 = vpop.f32.mrf.mxu0
  %v905 = vadd.f32 %v891, %v904
  %906 = vmatmul.bf16.gmra.mxu0 %v432
  %v907 = vpop.f32.mrf.mxu0
  %v908 = vadd.f32 %v891, %v907
  %v909 = vpop.f32.mrf.mxu0
  %v910 = vadd.f32 %v891, %v909
  %911 = vmatmul.bf16.gmra.mxu0 %v434
  %v912 = vpop.f32.mrf.mxu0
  %v913 = vadd.f32 %v891, %v912
  %v914 = vpop.f32.mrf.mxu0
  %v915 = vadd.f32 %v891, %v914
  %916 = vmatmul.bf16.gmra.mxu0 %v436
  %v917 = vpop.f32.mrf.mxu0
  %v918 = vadd.f32 %v891, %v917
  %v919 = vpop.f32.mrf.mxu0
  %v920 = vadd.f32 %v891, %v919
  %921 = vmatmul.bf16.gmra.mxu0 %v438
  %v922 = vpop.f32.mrf.mxu0
  %v923 = vadd.f32 %v891, %v922
  %v924 = vpop.f32.mrf.mxu0
  %v925 = vadd.f32 %v891, %v924
  %926 = vmatmul.bf16.gmra.mxu0 %v440
  %v927 = vpop.f32.mrf.mxu0
  %v928 = vadd.f32 %v891, %v927
  %v929 = vpop.f32.mrf.mxu0
  %v930 = vadd.f32 %v891, %v929
  %931 = vmatmul.bf16.gmra.mxu0 %v442
  %v932 = vpop.f32.mrf.mxu0
  %v933 = vadd.f32 %v891, %v932
  %v934 = vpop.f32.mrf.mxu0
  %v935 = vadd.f32 %v891, %v934
  %936 = vmatmul.bf16.gmra.mxu0 %v444
  %v937 = vpop.f32.mrf.mxu0
  %v938 = vadd.f32 %v891, %v937
  %v939 = vpop.f32.mrf.mxu0
  %v940 = vadd.f32 %v891, %v939
  %941 = vmatmul.bf16.gmra.mxu0 %v446
  %v942 = vpop.f32.mrf.mxu0
  %v943 = vadd.f32 %v891, %v942
  %v944 = vpop.f32.mrf.mxu0
  %v945 = vadd.f32 %v891, %v944
  %946 = vmatmul.bf16.gmra.mxu0 %v448
  %v947 = vpop.f32.mrf.mxu0
  %v948 = vadd.f32 %v891, %v947
  %v949 = vpop.f32.mrf.mxu0
  %v950 = vadd.f32 %v891, %v949
  %951 = vmatmul.bf16.gmra.mxu0 %v450
  %v952 = vpop.f32.mrf.mxu0
  %v953 = vadd.f32 %v891, %v952
  %v954 = vpop.f32.mrf.mxu0
  %v955 = vadd.f32 %v891, %v954
  %956 = vmatmul.bf16.gmra.mxu0 %v452
  %v957 = vpop.f32.mrf.mxu0
  %v958 = vadd.f32 %v891, %v957
  %v959 = vpop.f32.mrf.mxu0
  %v960 = vadd.f32 %v891, %v959
  %961 = vmatmul.bf16.gmra.mxu0 %v454
  %v962 = vpop.f32.mrf.mxu0
  %v963 = vadd.f32 %v891, %v962
  %v964 = vpop.f32.mrf.mxu0
  %v965 = vadd.f32 %v891, %v964
  %966 = vmatmul.bf16.gmra.mxu0 %v456
  %v967 = vpop.f32.mrf.mxu0
  %v968 = vadd.f32 %v891, %v967
  %v969 = vpop.f32.mrf.mxu0
  %v970 = vadd.f32 %v891, %v969
  %971 = vmatmul.bf16.gmra.mxu0 %v458
  %v972 = vpop.f32.mrf.mxu0
  %v973 = vadd.f32 %v891, %v972
  %v974 = vpop.f32.mrf.mxu0
  %v975 = vadd.f32 %v891, %v974
  %976 = vmatmul.bf16.gmra.mxu0 %v460
  %v977 = vpop.f32.mrf.mxu0
  %v978 = vadd.f32 %v891, %v977
  %v979 = vpop.f32.mrf.mxu0
  %v980 = vadd.f32 %v891, %v979
  %981 = vdwg.mxu0
  %982 = vmatpush.bf16.msra.mxu0 %v888
  %983 = vmatpush.bf16.msra.mxu0 %v887
  %984 = vmatpush.bf16.msra.mxu0 %v886
  %985 = vmatpush.bf16.msra.mxu0 %v885
  %986 = vmatpush.bf16.msra.mxu0 %v884
  %987 = vmatpush.bf16.msra.mxu0 %v883
  %988 = vmatpush.bf16.msra.mxu0 %v882
  %989 = vmatpush.bf16.msra.mxu0 %v881
  %990 = vmatmul.bf16.gmra.mxu0 %v431
  %v991 = vpop.f32.mrf.mxu0
  %v992 = vadd.f32 %v903, %v991
  %v993 = vpop.f32.mrf.mxu0
  %v994 = vadd.f32 %v905, %v993
  %995 = vmatmul.bf16.gmra.mxu0 %v433
  %v996 = vpop.f32.mrf.mxu0
  %v997 = vadd.f32 %v908, %v996
  %v998 = vpop.f32.mrf.mxu0
  %v999 = vadd.f32 %v910, %v998
  %1000 = vmatmul.bf16.gmra.mxu0 %v435
  %v1001 = vpop.f32.mrf.mxu0
  %v1002 = vadd.f32 %v913, %v1001
  %v1003 = vpop.f32.mrf.mxu0
  %v1004 = vadd.f32 %v915, %v1003
  %1005 = vmatmul.bf16.gmra.mxu0 %v437
  %v1006 = vpop.f32.mrf.mxu0
  %v1007 = vadd.f32 %v918, %v1006
  %v1008 = vpop.f32.mrf.mxu0
  %v1009 = vadd.f32 %v920, %v1008
  %1010 = vmatmul.bf16.gmra.mxu0 %v439
  %v1011 = vpop.f32.mrf.mxu0
  %v1012 = vadd.f32 %v923, %v1011
  %v1013 = vpop.f32.mrf.mxu0
  %v1014 = vadd.f32 %v925, %v1013
  %1015 = vmatmul.bf16.gmra.mxu0 %v441
  %v1016 = vpop.f32.mrf.mxu0
  %v1017 = vadd.f32 %v928, %v1016
  %v1018 = vpop.f32.mrf.mxu0
  %v1019 = vadd.f32 %v930, %v1018
  %1020 = vmatmul.bf16.gmra.mxu0 %v443
  %v1021 = vpop.f32.mrf.mxu0
  %v1022 = vadd.f32 %v933, %v1021
  %v1023 = vpop.f32.mrf.mxu0
  %v1024 = vadd.f32 %v935, %v1023
  %1025 = vmatmul.bf16.gmra.mxu0 %v445
  %v1026 = vpop.f32.mrf.mxu0
  %v1027 = vadd.f32 %v938, %v1026
  %v1028 = vpop.f32.mrf.mxu0
  %v1029 = vadd.f32 %v940, %v1028
  %1030 = vmatmul.bf16.gmra.mxu0 %v447
  %v1031 = vpop.f32.mrf.mxu0
  %v1032 = vadd.f32 %v943, %v1031
  %v1033 = vpop.f32.mrf.mxu0
  %v1034 = vadd.f32 %v945, %v1033
  %1035 = vmatmul.bf16.gmra.mxu0 %v449
  %v1036 = vpop.f32.mrf.mxu0
  %v1037 = vadd.f32 %v948, %v1036
  %v1038 = vpop.f32.mrf.mxu0
  %v1039 = vadd.f32 %v950, %v1038
  %1040 = vmatmul.bf16.gmra.mxu0 %v451
  %v1041 = vpop.f32.mrf.mxu0
  %v1042 = vadd.f32 %v953, %v1041
  %v1043 = vpop.f32.mrf.mxu0
  %v1044 = vadd.f32 %v955, %v1043
  %1045 = vmatmul.bf16.gmra.mxu0 %v453
  %v1046 = vpop.f32.mrf.mxu0
  %v1047 = vadd.f32 %v958, %v1046
  %v1048 = vpop.f32.mrf.mxu0
  %v1049 = vadd.f32 %v960, %v1048
  %1050 = vmatmul.bf16.gmra.mxu0 %v455
  %v1051 = vpop.f32.mrf.mxu0
  %v1052 = vadd.f32 %v963, %v1051
  %v1053 = vpop.f32.mrf.mxu0
  %v1054 = vadd.f32 %v965, %v1053
  %1055 = vmatmul.bf16.gmra.mxu0 %v457
  %v1056 = vpop.f32.mrf.mxu0
  %v1057 = vadd.f32 %v968, %v1056
  %v1058 = vpop.f32.mrf.mxu0
  %v1059 = vadd.f32 %v970, %v1058
  %1060 = vmatmul.bf16.gmra.mxu0 %v459
  %v1061 = vpop.f32.mrf.mxu0
  %v1062 = vadd.f32 %v973, %v1061
  %v1063 = vpop.f32.mrf.mxu0
  %v1064 = vadd.f32 %v975, %v1063
  %1065 = vmatmul.bf16.gmra.mxu0 %v461
  %v1066 = vpop.f32.mrf.mxu0
  %v1067 = vadd.f32 %v978, %v1066
  %v1068 = vpop.f32.mrf.mxu0
  %v1069 = vadd.f32 %v980, %v1068
  %1070 = vdwg.mxu0
  %1071 = vst [vmem:[%s6] sm:$0xff] %v992
  %1072 = vst [vmem:[%s6 + $0x8] sm:$0xff] %v994
  %1073 = vst [vmem:[%s6 + $0x10] sm:$0xff] %v997
  %1074 = vst [vmem:[%s6 + $0x18] sm:$0xff] %v999
  %1075 = vst [vmem:[%s6 + $0x20] sm:$0xff] %v1002
  %1076 = vst [vmem:[%s6 + $0x28] sm:$0xff] %v1004
  %1077 = vst [vmem:[%s6 + $0x30] sm:$0xff] %v1007
  %1078 = vst [vmem:[%s6 + $0x38] sm:$0xff] %v1009
  %1079 = vst [vmem:[%s6 + $0x40] sm:$0xff] %v1012
  %1080 = vst [vmem:[%s6 + $0x48] sm:$0xff] %v1014
  %1081 = vst [vmem:[%s6 + $0x50] sm:$0xff] %v1017
  %1082 = vst [vmem:[%s6 + $0x58] sm:$0xff] %v1019
  %1083 = vst [vmem:[%s6 + $0x60] sm:$0xff] %v1022
  %1084 = vst [vmem:[%s6 + $0x68] sm:$0xff] %v1024
  %1085 = vst [vmem:[%s6 + $0x70] sm:$0xff] %v1027
  %1086 = vst [vmem:[%s6 + $0x78] sm:$0xff] %v1029
  %1087 = vst [vmem:[%s6 + $0x80] sm:$0xff] %v1032
  %1088 = vst [vmem:[%s6 + $0x88] sm:$0xff] %v1034
  %1089 = vst [vmem:[%s6 + $0x90] sm:$0xff] %v1037
  %1090 = vst [vmem:[%s6 + $0x98] sm:$0xff] %v1039
  %1091 = vst [vmem:[%s6 + $0xa0] sm:$0xff] %v1042
  %1092 = vst [vmem:[%s6 + $0xa8] sm:$0xff] %v1044
  %1093 = vst [vmem:[%s6 + $0xb0] sm:$0xff] %v1047
  %1094 = vst [vmem:[%s6 + $0xb8] sm:$0xff] %v1049
  %1095 = vst [vmem:[%s6 + $0xc0] sm:$0xff] %v1052
  %1096 = vst [vmem:[%s6 + $0xc8] sm:$0xff] %v1054
  %1097 = vst [vmem:[%s6 + $0xd0] sm:$0xff] %v1057
  %1098 = vst [vmem:[%s6 + $0xd8] sm:$0xff] %v1059
  %1099 = vst [vmem:[%s6 + $0xe0] sm:$0xff] %v1062
  %1100 = vst [vmem:[%s6 + $0xe8] sm:$0xff] %v1064
  %1101 = vst [vmem:[%s6 + $0xf0] sm:$0xff] %v1067
  %1102 = vst [vmem:[%s6 + $0xf8] sm:$0xff] %v1069
  // Predicated region
  $region26: #{gcn_net.1} parent=0 // pred_check
    _
  $region27: #{gcn_net.1} parent=0 // pred_check_branch
    %1104 = sbr.rel (0) target = $region29
  $region28: #{gcn_net.1} parent=0 // pred_region
    _
  $region29: #{gcn_net.1} parent=0 // pred_fallthru
    _
  // Predicated region
  $region30: #{gcn_net.1} parent=0 // pred_check
    _
  $region31: #{gcn_net.1} parent=0 // pred_check_branch
    %1106 = sbr.rel (0) target = $region33
  $region32: #{gcn_net.1} parent=0 // pred_region
    _
  $region33: #{gcn_net.1} parent=0 // pred_fallthru
    _

</llo_original>
